<compile_context>
chip_gen: v7x
topology: tpu7x:2x2x1
jax: 0.10.0
libtpu: 0.0.40
codegen_flags: <defaults>
</compile_context>

<pallas_src>
import jax
import jax.numpy as jnp
from jax import lax
from jax.experimental import pallas as pl
from jax.experimental.pallas import tpu as pltpu

_EPS = 1e-12          # torch F.normalize eps
_LANE = 128
_SUBLANE = 8


def _cdiv(a, b):
    return -(-a // b)


def _round_up(a, m):
    return _cdiv(a, m) * m


def _make_encoder_kernel(num_layers, tk, n_valid_items, mask_tail, w0_resident):
    """num_layers = len(user_preference_encoder) + 1 (the transform layer)."""

    def kernel(x_ref, *rest):
        # rest = (w0, b0, w1, b1, ..., o_ref, acc_ref)
        o_ref, acc_ref = rest[-2], rest[-1]
        wb = rest[:-2]

        ki = pl.program_id(1)
        nk = pl.num_programs(1)

        @pl.when(ki == 0)
        def _init():
            acc_ref[...] = jnp.zeros_like(acc_ref)

        # Normalization math in f32 (v5e VPU/EUP have no bf16); input streamed as bf16.
        x = x_ref[...].astype(jnp.float32)            # [TB, Gp, TK]
        tb, g, tkk = x.shape

        if mask_tail:
            # Last item chunk reads past I: zero those lanes (stale VMEM may hold anything).
            start = ki * tk
            col = lax.broadcasted_iota(jnp.int32, x.shape, 2)
            x = jnp.where(col < (n_valid_items - start), x, 0.0)

        # F.normalize: L2 over dim=1 (group axis) -> per (batch, item) column, so it is
        # exact per item chunk. rsqrt (EUP) instead of sqrt + divide (VPU).
        ss = jnp.sum(x * x, axis=1, keepdims=True)    # [TB, 1, TK]
        xn = x * lax.rsqrt(jnp.maximum(ss, _EPS * _EPS))
        xn2 = xn.reshape(tb * g, tkk).astype(jnp.bfloat16)

        if w0_resident:
            # Whole (padded) w0 lives in VMEM; slice the current item chunk.
            w0 = wb[0][pl.ds(pl.multiple_of(ki * tk, tk), tk), :]
        else:
            w0 = wb[0][...]                           # [TK, H0p] tile (bf16)

        # First Linear: bf16 MXU matmul, f32 accumulation, streamed over the item axis.
        acc_ref[...] += jnp.dot(xn2, w0, preferred_element_type=jnp.float32)

        @pl.when(ki == nk - 1)
        def _finalize():
            h = jnp.tanh(acc_ref[...] + wb[1][...])   # layer-0 bias + tanh
            for li in range(1, num_layers):           # small resident layers, f32
                w = wb[2 * li][...]
                b = wb[2 * li + 1][...]
                h = jnp.tanh(jnp.dot(h, w, preferred_element_type=jnp.float32) + b)
            o_ref[...] = h.reshape(o_ref.shape).astype(o_ref.dtype)

    return kernel


def encoder_forward(user_items, layer_params, transform_w, transform_b, *,
                    block_b=None, block_k=None, vmem_limit_bytes=None):
    """GroupIM Encoder forward pass.

    user_items  : [B, G, I]
    layer_params: list of (w [in, out], b [out]) for user_preference_encoder
                  (weights pre-transposed vs. torch's [out, in] layout)
    transform_w : [E, E], transform_b: [E]
    returns     : [B, G, E]
    """
    B, G, I = user_items.shape
    out_dtype = user_items.dtype
    if vmem_limit_bytes is None:
        vmem_limit_bytes = 48 * 1024 * 1024   # safe on v7x (64 MiB); raise on v5e/v6e.

    params = [(jnp.asarray(w), jnp.asarray(b))
              for (w, b) in list(layer_params) + [(transform_w, transform_b)]]

    # ---- pad hidden / output dims to lane (128) multiples (lane-dense acc & stores) ----
    padded = []
    prev_out_p = None
    for idx, (w, b) in enumerate(params):
        din, dout = w.shape
        dout_p = _round_up(dout, _LANE)
        din_p = din if idx == 0 else prev_out_p       # item axis handled separately
        wp = w
        if (din_p, dout_p) != (din, dout):
            wp = jnp.pad(w, ((0, din_p - din), (0, dout_p - dout)))
        bp = b if dout_p == dout else jnp.pad(b, (0, dout_p - dout))
        padded.append((wp.astype(jnp.float32), bp.reshape(1, dout_p).astype(jnp.float32)))
        prev_out_p = dout_p
    H0p = padded[0][0].shape[1]
    Ep = padded[-1][0].shape[1]
    E = params[-1][0].shape[1]

    # ---- group axis: pad to a sublane multiple so the in-kernel reshape is layout-free ----
    Gp = _round_up(G, _SUBLANE)
    x = user_items
    if Gp != G:
        # TODO(synk): this copies the input once in HBM; only taken when G % 8 != 0.
        x = jnp.pad(x, ((0, 0), (0, Gp - G), (0, 0)))
    # Stream the dominant [B,G,I] tensor as bf16 (halves HBM bytes); math stays f32 in-kernel.
    x = x.astype(jnp.bfloat16)

    # ---- item-axis tiling (no padding of x: tail handled in-kernel) ----
    bk = 2048 if block_k is None else block_k
    if I <= bk:
        TK, n_k, Ip = I, 1, I                          # single chunk, full-extent block
    else:
        TK = max(_LANE, (bk // _LANE) * _LANE)
        n_k = _cdiv(I, TK)
        Ip = n_k * TK

    # ---- batch tiling: fill the MXU M dim but keep >=2 batch blocks (megacore / v7x) ----
    if block_b is None:
        TB = min(max(1, _cdiv(256, Gp)), B)
        if B >= 2 and _cdiv(B, TB) < 2:
            TB = _cdiv(B, 2)
    else:
        TB = max(1, min(block_b, B))

    # ---- VMEM budget: shrink TK, then TB, until the tile set fits ----
    out_isz = jnp.dtype(out_dtype).itemsize
    rest_bytes = sum(2 * (w.size + b.size) * 4 for (w, b) in padded[1:]) + 2 * H0p * 4

    def _usage(tb, tk, ip, resident):
        xb = 2 * tb * Gp * tk * 2                      # bf16 x, double buffered
        w0b = 2 * (ip if resident else tk) * H0p * 2   # bf16 w0
        accb = tb * Gp * H0p * 4
        outb = 2 * tb * Gp * Ep * out_isz
        return xb + w0b + accb + outb + rest_bytes

    budget = int(0.85 * vmem_limit_bytes)
    while _usage(TB, TK, Ip, False) > budget and (TK > _LANE or TB > 1):
        if TK > _LANE:
            TK = max(_LANE, ((TK // 2) // _LANE) * _LANE)
            n_k = _cdiv(I, TK)
            Ip = n_k * TK
        else:
            TB = max(1, TB // 2)
    mask_tail = (Ip != I)

    # Keep the whole first-layer weight VMEM-resident when it also fits the budget
    # (removes re-streaming of w0 once per batch block).
    resident_w0 = (n_k > 1) and (_usage(TB, TK, Ip, True) <= budget)

    # ---- prepare w0 (bf16, zero-padded rows so tail chunks never touch stale data) ----
    w0, b0 = padded[0]
    if Ip != w0.shape[0]:
        w0 = jnp.pad(w0, ((0, Ip - w0.shape[0]), (0, 0)))
    w0 = w0.astype(jnp.bfloat16)

    operands = [x, w0, b0]
    if resident_w0:
        w0_spec = pl.BlockSpec((Ip, H0p), lambda bi, ki: (0, 0))
    else:
        w0_spec = pl.BlockSpec((TK, H0p), lambda bi, ki: (ki, 0))
    in_specs = [pl.BlockSpec((TB, Gp, TK), lambda bi, ki: (bi, 0, ki)),
                w0_spec,
                pl.BlockSpec((1, H0p), lambda bi, ki: (0, 0))]
    for (w, b) in padded[1:]:                          # small resident layers
        din_p, dout_p = w.shape
        operands += [w, b]
        in_specs += [pl.BlockSpec((din_p, dout_p), lambda bi, ki: (0, 0)),
                     pl.BlockSpec((1, dout_p), lambda bi, ki: (0, 0))]

    kernel = _make_encoder_kernel(len(padded), TK, I, mask_tail, resident_w0)

    out = pl.pallas_call(
        kernel,
        out_shape=jax.ShapeDtypeStruct((B, Gp, Ep), out_dtype),
        grid=(_cdiv(B, TB), n_k),
        in_specs=in_specs,
        out_specs=pl.BlockSpec((TB, Gp, Ep), lambda bi, ki: (bi, 0, 0)),
        scratch_shapes=[pltpu.VMEM((TB * Gp, H0p), jnp.float32)],
        compiler_params=pltpu.CompilerParams(
            dimension_semantics=("parallel", "arbitrary"),
            vmem_limit_bytes=vmem_limit_bytes),
    )(*operands)

    if (Gp, Ep) != (G, E):
        out = out[:, :G, :E]
    return out


def _reference(user_items, layer_params, transform_w, transform_b):
    """Pure-JAX f32 reference mirroring the torch forward."""
    norm = jnp.sqrt(jnp.sum(user_items * user_items, axis=1, keepdims=True))
    h = user_items / jnp.maximum(norm, _EPS)
    for (w, b) in list(layer_params) + [(transform_w, transform_b)]:
        h = jnp.tanh(h @ w + b)
    return h


if __name__ == "__main__":

    def xavier(k, din, dout):
        # torch init: xavier_uniform_ on weight [out, in]; transpose for x @ W.
        bound = (6.0 / (din + dout)) ** 0.5
        return jax.random.uniform(k, (dout, din), minval=-bound, maxval=bound,
                                  dtype=jnp.float32).T

    def run_case(seed, B, G, n_items, user_layers, embedding_dim, **kw):
        keys = jax.random.split(jax.random.PRNGKey(seed), 2 * len(user_layers) + 3)
        # Binary bag-of-words user-item interactions (exact in bf16).
        x = (jax.random.uniform(keys[0], (B, G, n_items)) < 0.15).astype(jnp.float32)
        layer_params = []
        din = n_items
        for i, h in enumerate(user_layers):
            w = xavier(keys[1 + 2 * i], din, h)
            b = 0.1 * jax.random.normal(keys[2 + 2 * i], (h,), jnp.float32)
            layer_params.append((w, b))
            din = h
        wt = xavier(keys[-2], embedding_dim, embedding_dim)
        bt = 0.1 * jax.random.normal(keys[-1], (embedding_dim,), jnp.float32)

        out = jax.block_until_ready(
            encoder_forward(x, layer_params, wt, bt, **kw))
        ref = _reference(x, layer_params, wt, bt)

        assert out.shape == (B, G, embedding_dim), out.shape
        # Tolerance covers bf16 first-layer matmul vs. f32 reference; semantic bugs
        # produce errors orders of magnitude larger.
        err = float(jnp.max(jnp.abs(out - ref)))
        assert err < 3e-2, err

    # 1) aligned small shapes, default (large-tile) heuristics: single item chunk.
    run_case(0, B=16, G=8, n_items=512, user_layers=[128], embedding_dim=128)
    # 2) ragged shapes: partial item chunk (mask), partial batch block, padded group
    #    axis, padded hidden/embedding dims, VMEM-resident w0 with in-kernel slicing.
    run_case(1, B=10, G=6, n_items=400, user_layers=[96], embedding_dim=96,
             block_b=4, block_k=128)

    print("KERNEL_OK")
</pallas_src>

<mosaic_0001>
module attributes {stable_mosaic.version = 11 : i64} {
  func.func @kernel(%arg0: i32, %arg1: i32, %arg2: memref<8x8x512xbf16, #tpu.memory_space<vmem>>, %arg3: memref<512x128xbf16, #tpu.memory_space<vmem>>, %arg4: memref<1x128xf32, #tpu.memory_space<vmem>>, %arg5: memref<128x128xf32, #tpu.memory_space<vmem>>, %arg6: memref<1x128xf32, #tpu.memory_space<vmem>>, %arg7: memref<8x8x128xf32, #tpu.memory_space<vmem>>, %arg8: memref<64x128xf32, #tpu.memory_space<vmem>>) attributes {dimension_semantics = [#tpu.dimension_semantics<parallel>, #tpu.dimension_semantics<arbitrary>], iteration_bounds = array<i64: 2, 1>, scalar_prefetch = 0 : i64, scratch_operands = 1 : i64, tpu.core_type = #tpu.core_type<tc>, window_params = [{transform_indices = @transform_0, window_bounds = array<i64: 8, 8, 512>}, {transform_indices = @transform_1, window_bounds = array<i64: 512, 128>}, {pipeline_mode = #tpu.pipeline_mode<synchronous>, transform_indices = @transform_2, window_bounds = array<i64: 1, 128>}, {pipeline_mode = #tpu.pipeline_mode<synchronous>, transform_indices = @transform_3, window_bounds = array<i64: 128, 128>}, {pipeline_mode = #tpu.pipeline_mode<synchronous>, transform_indices = @transform_4, window_bounds = array<i64: 1, 128>}, {transform_indices = @transform_5, window_bounds = array<i64: 8, 8, 128>}]} {
    %c0_i32 = arith.constant 0 : i32
    %0 = arith.cmpi eq, %arg1, %c0_i32 : i32
    %1 = arith.extui %0 : i1 to i32
    %c0_i32_0 = arith.constant 0 : i32
    %2 = arith.cmpi ne, %1, %c0_i32_0 : i32
    scf.if %2 {
      %cst_13 = arith.constant 0.000000e+00 : f32
      %23 = vector.broadcast %cst_13 : f32 to vector<64x128xf32>
      %c0_14 = arith.constant 0 : index
      %c0_15 = arith.constant 0 : index
      %24 = vector.load %arg8[%c0_14, %c0_15] : memref<64x128xf32, #tpu.memory_space<vmem>>, vector<64x128xf32>
      tpu.vector_store %arg8[%c0_14, %c0_15], %23 {strides = array<i32>} : memref<64x128xf32, #tpu.memory_space<vmem>>, vector<64x128xf32>,
    } else {
    }
    %c0 = arith.constant 0 : index
    %c0_1 = arith.constant 0 : index
    %c0_2 = arith.constant 0 : index
    %3 = vector.load %arg2[%c0, %c0_1, %c0_2] : memref<8x8x512xbf16, #tpu.memory_space<vmem>>, vector<8x8x512xbf16>
    %4 = arith.extf %3 : vector<8x8x512xbf16> to vector<8x8x512xf32>
    %5 = arith.mulf %4, %4 : vector<8x8x512xf32>
    %cst = arith.constant dense<0.000000e+00> : vector<8x512xf32>
    %6 = vector.multi_reduction <add>, %5, %cst [1] : vector<8x8x512xf32> to vector<8x512xf32>
    %7 = vector.shape_cast %6 : vector<8x512xf32> to vector<8x1x512xf32>
    %cst_3 = arith.constant 1.000000e-24 : f32
    %8 = vector.broadcast %cst_3 : f32 to vector<8x1x512xf32>
    %9 = arith.maximumf %7, %8 : vector<8x1x512xf32>
    %10 = math.rsqrt %9 : vector<8x1x512xf32>
    %11 = vector.broadcast %10 : vector<8x1x512xf32> to vector<8x8x512xf32>
    %12 = arith.mulf %4, %11 : vector<8x8x512xf32>
    %13 = vector.shape_cast %12 : vector<8x8x512xf32> to vector<64x512xf32>
    %14 = arith.truncf %13 : vector<64x512xf32> to vector<64x512xbf16>
    %c0_4 = arith.constant 0 : index
    %c0_5 = arith.constant 0 : index
    %15 = vector.load %arg3[%c0_4, %c0_5] : memref<512x128xbf16, #tpu.memory_space<vmem>>, vector<512x128xbf16>
    %c0_6 = arith.constant 0 : index
    %c0_7 = arith.constant 0 : index
    %16 = vector.load %arg8[%c0_6, %c0_7] : memref<64x128xf32, #tpu.memory_space<vmem>>, vector<64x128xf32>
    %cst_8 = arith.constant dense<0.000000e+00> : vector<64x128xf32>
    %17 = tpu.matmul %14, %15, %cst_8 {dimension_numbers = #tpu.dot_dimension_numbers<[1], [0], [0], [1], [0, 0, 1, 1], [], []>} : vector<64x512xbf16>, vector<512x128xbf16>, vector<64x128xf32> -> vector<64x128xf32>
    %18 = arith.addf %16, %17 : vector<64x128xf32>
    %c0_9 = arith.constant 0 : index
    %c0_10 = arith.constant 0 : index
    %19 = vector.load %arg8[%c0_9, %c0_10] : memref<64x128xf32, #tpu.memory_space<vmem>>, vector<64x128xf32>
    tpu.vector_store %arg8[%c0_9, %c0_10], %18 {strides = array<i32>} : memref<64x128xf32, #tpu.memory_space<vmem>>, vector<64x128xf32>,
    %c0_i32_11 = arith.constant 0 : i32
    %20 = arith.cmpi eq, %arg1, %c0_i32_11 : i32
    %21 = arith.extui %20 : i1 to i32
    %c0_i32_12 = arith.constant 0 : i32
    %22 = arith.cmpi ne, %21, %c0_i32_12 : i32
    scf.if %22 {
      %c0_13 = arith.constant 0 : index
      %c0_14 = arith.constant 0 : index
      %23 = vector.load %arg8[%c0_13, %c0_14] : memref<64x128xf32, #tpu.memory_space<vmem>>, vector<64x128xf32>
      %c0_15 = arith.constant 0 : index
      %c0_16 = arith.constant 0 : index
      %24 = vector.load %arg4[%c0_15, %c0_16] : memref<1x128xf32, #tpu.memory_space<vmem>>, vector<1x128xf32>
      %25 = vector.broadcast %24 : vector<1x128xf32> to vector<64x128xf32>
      %26 = arith.addf %23, %25 : vector<64x128xf32>
      %27 = math.tanh %26 : vector<64x128xf32>
      %c0_17 = arith.constant 0 : index
      %c0_18 = arith.constant 0 : index
      %28 = vector.load %arg5[%c0_17, %c0_18] : memref<128x128xf32, #tpu.memory_space<vmem>>, vector<128x128xf32>
      %c0_19 = arith.constant 0 : index
      %c0_20 = arith.constant 0 : index
      %29 = vector.load %arg6[%c0_19, %c0_20] : memref<1x128xf32, #tpu.memory_space<vmem>>, vector<1x128xf32>
      %cst_21 = arith.constant dense<0.000000e+00> : vector<64x128xf32>
      %30 = tpu.matmul %27, %28, %cst_21 {dimension_numbers = #tpu.dot_dimension_numbers<[1], [0], [0], [1], [0, 0, 1, 1], [], []>} : vector<64x128xf32>, vector<128x128xf32>, vector<64x128xf32> -> vector<64x128xf32>
      %31 = vector.broadcast %29 : vector<1x128xf32> to vector<64x128xf32>
      %32 = arith.addf %30, %31 : vector<64x128xf32>
      %33 = math.tanh %32 : vector<64x128xf32>
      %34 = vector.shape_cast %33 : vector<64x128xf32> to vector<8x8x128xf32>
      %c0_22 = arith.constant 0 : index
      %c0_23 = arith.constant 0 : index
      %c0_24 = arith.constant 0 : index
      %35 = vector.load %arg7[%c0_22, %c0_23, %c0_24] : memref<8x8x128xf32, #tpu.memory_space<vmem>>, vector<8x8x128xf32>
      tpu.vector_store %arg7[%c0_22, %c0_23, %c0_24], %34 {strides = array<i32>} : memref<8x8x128xf32, #tpu.memory_space<vmem>>, vector<8x8x128xf32>,
    } else {
    }
    return
  }
  func.func @transform_0(%arg0: i32, %arg1: i32) -> (i32, i32, i32) {
    %c0_i32 = arith.constant 0 : i32
    %c0_i32_0 = arith.constant 0 : i32
    return %arg0, %c0_i32, %arg1 : i32, i32, i32
  }
  func.func @transform_1(%arg0: i32, %arg1: i32) -> (i32, i32) {
    %c0_i32 = arith.constant 0 : i32
    %c0_i32_0 = arith.constant 0 : i32
    return %arg1, %c0_i32 : i32, i32
  }
  func.func @transform_2(%arg0: i32, %arg1: i32) -> (i32, i32) {
    %c0_i32 = arith.constant 0 : i32
    %c0_i32_0 = arith.constant 0 : i32
    %c0_i32_1 = arith.constant 0 : i32
    return %c0_i32, %c0_i32_0 : i32, i32
  }
  func.func @transform_3(%arg0: i32, %arg1: i32) -> (i32, i32) {
    %c0_i32 = arith.constant 0 : i32
    %c0_i32_0 = arith.constant 0 : i32
    %c0_i32_1 = arith.constant 0 : i32
    return %c0_i32, %c0_i32_0 : i32, i32
  }
  func.func @transform_4(%arg0: i32, %arg1: i32) -> (i32, i32) {
    %c0_i32 = arith.constant 0 : i32
    %c0_i32_0 = arith.constant 0 : i32
    %c0_i32_1 = arith.constant 0 : i32
    return %c0_i32, %c0_i32_0 : i32, i32
  }
  func.func @transform_5(%arg0: i32, %arg1: i32) -> (i32, i32, i32) {
    %c0_i32 = arith.constant 0 : i32
    %c0_i32_0 = arith.constant 0 : i32
    %c0_i32_1 = arith.constant 0 : i32
    return %arg0, %c0_i32, %c0_i32_0 : i32, i32, i32
  }
}

</mosaic_0001>

<llo_original>
// kernel: tpu_custom_call.1
$region0: #{tpu_custom_call.1}
  #allocation0 [shape = 'u32[]', space=smem, size = 0x4, offset = 0x4, fixed_abs, tag = 'smem constant byte address 0x4 - core index']
  #allocation1 [shape = 'u32[144,128]{1,0:T(1,128)}', space=vmem, size = 0x12000, scoped, tag = 'internal scratch']
  #allocation2 [shape = 'f32[64,128]{1,0:T(8,128)}', space=vmem, size = 0x8000, scoped, tag = 'scratch operand']
  %s0 = inlined_call_operand.hbm [shape: bf16[16,8,512], index: 0, kind: input, shape index: {}]
  %s1 = inlined_call_operand.hbm [shape: bf16[512,128], index: 1, kind: input, shape index: {}]
  %s2 = inlined_call_operand.vmem [shape: f32[1,128], index: 2, kind: input, shape index: {}]
  %s3 = inlined_call_operand.hbm [shape: f32[128,128], index: 3, kind: input, shape index: {}]
  %s4 = inlined_call_operand.vmem [shape: f32[1,128], index: 4, kind: input, shape index: {}]
  %s5 = inlined_call_operand.hbm [shape: f32[16,8,128], index: 5, kind: output, shape index: {}]
  %s6 = sld [smem:[#allocation0]]
  $region73: #{tpu_custom_call.1} parent=0
    _
  %s8 = ssub.s32 1, %s6
  %s9 = scalar_select 0, %s8, %s6
  $region1: #{tpu_custom_call.1} parent=0
    #allocation3 [shape = 'u8[131072]{0}', space=vmem, size = 0x20000, scoped, tag = 'input window, operand 0']
    #allocation4 [shape = 's32[2]{0}', space=sflag, size = 0x8, scoped, tag = 'scoped memory for tpu_custom_call.1']
    #allocation5 [shape = 's32[2]{0}', space=sflag, size = 0x8, scoped, tag = 'scoped memory for tpu_custom_call.1']
    #allocation6 [shape = 'u8[131072]{0}', space=vmem, size = 0x20000, scoped, tag = 'input window, operand 1, single buffered']
    #allocation7 [shape = 's32[1]{0}', space=sflag, size = 0x4, scoped, tag = 'scoped memory for tpu_custom_call.1']
    #allocation8 [shape = 'u8[65536]{0}', space=vmem, size = 0x10000, scoped, tag = 'input window, operand 3, single buffered']
    #allocation9 [shape = 'u8[65536]{0}', space=vmem, size = 0x10000, scoped, tag = 'output window, operand 0']
    %10 = vsyncpa [#allocation4], 0
    %s11 = scalar_lea.sflag [#allocation4], 1
    %12 = vsyncpa %s11, 0
    %13 = vsyncpa [#allocation7], 0
    %14 = vsyncpa [#allocation5], 0
    %s15 = scalar_lea.sflag [#allocation5], 1
    %16 = vsyncpa %s15, 0
    loop: start=0, step=1, limit=4
    $region2: #{tpu_custom_call.1} parent=1 // loop_pre_header
      _
    $region3: #{tpu_custom_call.1} parent=1 // loop_header
      %s18 = sphi 0, %s22
      %p19 = scmp.ge.s32.totalorder %s18, 4
      %s25 = sphi 0, %s37
      %s26 = sphi 0, %s33
      %s27 = sphi 0, %s25
      %s28 = sphi 0, %s26
      %s29 = sphi 0, %s27
      %s30 = sphi 0, %s28
      %s42 = sphi 0, %s44
      %s45 = sphi 0, %s42
      %s46 = sphi 0, %s45
      %s62 = sphi 0, %s46
      %s68 = sphi 0, %s70
      %s71 = sphi 0, %s68
      %s72 = sphi 0, %s71
      %s88 = sphi 0, %s72
      %s92 = sphi 0, %s92
      %s94 = sphi 0, %s92
      %s95 = sphi 0, %s94
      %s109 = sphi 0, %s95
      %s113 = sphi 0, %s113
      %s115 = sphi 0, %s113
      %s116 = sphi 0, %s115
      %s130 = sphi 0, %s116
      %s134 = sphi 0, %s134
      %s136 = sphi 0, %s134
      %s137 = sphi 0, %s136
      %s151 = sphi 0, %s137
      %s157 = sphi 0, %s159
      %s160 = sphi 0, %s157
      %s161 = sphi 0, %s160
      %s177 = sphi 0, %s161
    $region4: #{tpu_custom_call.1} parent=1 // loop_header_branch
      %21 = sbr.rel (%p19) target = $region8
    $region5: #{tpu_custom_call.1} parent=1 // loop_body
      %s23 = ssub.s32 %s18, 1
      %s24 = ssub.s32 %s18, 2
      %s31 = sadd.s32 1, %s26
      %p32 = scmp.ge.s32.totalorder %s31, 1
      %s33 = scalar_select %p32, 0, %s31
      %s34 = sadd.s32 1, %s25
      %s35 = scalar_select %p32, %s34, %s25
      %p36 = scmp.ge.s32.totalorder %s35, 2
      %s37 = scalar_select %p36, 0, %s35
      %s38 = ssub.s32 %s25, %s37
      %s39 = ssub.s32 %s26, %s33
      %s40 = sor.u32 %s38, %s39
      %p41 = scmp.eq.s32.totalorder %s40, 0
      %s43 = sadd.s32 %s42, 1
      %s44 = scalar_select %p41, %s42, %s43
      %p47 = pneg %p41
      %p48 = scmp.eq.s32.totalorder %s18, 1
      %p49 = por %p47, %p48
      %p50 = scmp.ne.s32.totalorder %s42, %s45
      %p51 = scmp.eq.s32.totalorder %s18, 0
      %p52 = por %p50, %p51
      %p53 = scmp.ne.s32.totalorder %s42, %s45
      %p54 = scmp.eq.s32.totalorder %s23, 1
      %p55 = por %p53, %p54
      %p56 = scmp.ne.s32.totalorder %s45, %s46
      %p57 = scmp.eq.s32.totalorder %s23, 0
      %p58 = por %p56, %p57
      %p59 = scmp.ne.s32.totalorder %s45, %s46
      %p60 = scmp.eq.s32.totalorder %s24, 1
      %p61 = por %p59, %p60
      %p63 = scmp.ne.s32.totalorder %s46, %s62
      %p64 = scmp.eq.s32.totalorder %s24, 0
      %p65 = por %p63, %p64
      %s66 = ssub.s32 %s26, %s33
      %p67 = scmp.eq.s32.totalorder %s66, 0
      %s69 = sadd.s32 %s68, 1
      %s70 = scalar_select %p67, %s68, %s69
      %p73 = pneg %p67
      %p74 = scmp.eq.s32.totalorder %s18, 1
      %p75 = por %p73, %p74
      %p76 = scmp.ne.s32.totalorder %s68, %s71
      %p77 = scmp.eq.s32.totalorder %s18, 0
      %p78 = por %p76, %p77
      %p79 = scmp.ne.s32.totalorder %s68, %s71
      %p80 = scmp.eq.s32.totalorder %s23, 1
      %p81 = por %p79, %p80
      %p82 = scmp.ne.s32.totalorder %s71, %s72
      %p83 = scmp.eq.s32.totalorder %s23, 0
      %p84 = por %p82, %p83
      %p85 = scmp.ne.s32.totalorder %s71, %s72
      %p86 = scmp.eq.s32.totalorder %s24, 1
      %p87 = por %p85, %p86
      %p89 = scmp.ne.s32.totalorder %s72, %s88
      %p90 = scmp.eq.s32.totalorder %s24, 0
      %p91 = por %p89, %p90
      %s93 = sadd.s32 %s92, 1
      %p96 = scmp.eq.s32.totalorder %s18, 1
      %p97 = scmp.ne.s32.totalorder %s92, %s94
      %p98 = scmp.eq.s32.totalorder %s18, 0
      %p99 = por %p97, %p98
      %p100 = scmp.ne.s32.totalorder %s92, %s94
      %p101 = scmp.eq.s32.totalorder %s23, 1
      %p102 = por %p100, %p101
      %p103 = scmp.ne.s32.totalorder %s94, %s95
      %p104 = scmp.eq.s32.totalorder %s23, 0
      %p105 = por %p103, %p104
      %p106 = scmp.ne.s32.totalorder %s94, %s95
      %p107 = scmp.eq.s32.totalorder %s24, 1
      %p108 = por %p106, %p107
      %p110 = scmp.ne.s32.totalorder %s95, %s109
      %p111 = scmp.eq.s32.totalorder %s24, 0
      %p112 = por %p110, %p111
      %s114 = sadd.s32 %s113, 1
      %p117 = scmp.eq.s32.totalorder %s18, 1
      %p118 = scmp.ne.s32.totalorder %s113, %s115
      %p119 = scmp.eq.s32.totalorder %s18, 0
      %p120 = por %p118, %p119
      %p121 = scmp.ne.s32.totalorder %s113, %s115
      %p122 = scmp.eq.s32.totalorder %s23, 1
      %p123 = por %p121, %p122
      %p124 = scmp.ne.s32.totalorder %s115, %s116
      %p125 = scmp.eq.s32.totalorder %s23, 0
      %p126 = por %p124, %p125
      %p127 = scmp.ne.s32.totalorder %s115, %s116
      %p128 = scmp.eq.s32.totalorder %s24, 1
      %p129 = por %p127, %p128
      %p131 = scmp.ne.s32.totalorder %s116, %s130
      %p132 = scmp.eq.s32.totalorder %s24, 0
      %p133 = por %p131, %p132
      %s135 = sadd.s32 %s134, 1
      %p138 = scmp.eq.s32.totalorder %s18, 1
      %p139 = scmp.ne.s32.totalorder %s134, %s136
      %p140 = scmp.eq.s32.totalorder %s18, 0
      %p141 = por %p139, %p140
      %p142 = scmp.ne.s32.totalorder %s134, %s136
      %p143 = scmp.eq.s32.totalorder %s23, 1
      %p144 = por %p142, %p143
      %p145 = scmp.ne.s32.totalorder %s136, %s137
      %p146 = scmp.eq.s32.totalorder %s23, 0
      %p147 = por %p145, %p146
      %p148 = scmp.ne.s32.totalorder %s136, %s137
      %p149 = scmp.eq.s32.totalorder %s24, 1
      %p150 = por %p148, %p149
      %p152 = scmp.ne.s32.totalorder %s137, %s151
      %p153 = scmp.eq.s32.totalorder %s24, 0
      %p154 = por %p152, %p153
      %s155 = ssub.s32 %s25, %s37
      %p156 = scmp.eq.s32.totalorder %s155, 0
      %s158 = sadd.s32 %s157, 1
      %s159 = scalar_select %p156, %s157, %s158
      %p162 = pneg %p156
      %p163 = scmp.eq.s32.totalorder %s18, 1
      %p164 = por %p162, %p163
      %p165 = scmp.ne.s32.totalorder %s157, %s160
      %p166 = scmp.eq.s32.totalorder %s18, 0
      %p167 = por %p165, %p166
      %p168 = scmp.ne.s32.totalorder %s157, %s160
      %p169 = scmp.eq.s32.totalorder %s23, 1
      %p170 = por %p168, %p169
      %p171 = scmp.ne.s32.totalorder %s160, %s161
      %p172 = scmp.eq.s32.totalorder %s23, 0
      %p173 = por %p171, %p172
      %p174 = scmp.ne.s32.totalorder %s160, %s161
      %p175 = scmp.eq.s32.totalorder %s24, 1
      %p176 = por %p174, %p175
      %p178 = scmp.ne.s32.totalorder %s161, %s177
      %p179 = scmp.eq.s32.totalorder %s24, 0
      %p180 = por %p178, %p179
      %p181 = scmp.le.s32.totalorder 1, %s18
      %p182 = scmp.lt.s32.totalorder %s18, 3
      %p183 = pnand %p181, %p182
      %p184 = pneg %p183
      // Predicated region
      $region9: #{tpu_custom_call.1} parent=5 // pred_check
        _
      $region10: #{tpu_custom_call.1} parent=5 // pred_check_branch
        %186 = sbr.rel (%p183) target = $region12
      $region11: #{tpu_custom_call.1} parent=5 // pred_region
        %s187 = ssub.s32 %s18, 1
        // Predicated region
        $region13: #{tpu_custom_call.1} parent=11 // pred_check
          %p188 = pneg %p84
        $region14: #{tpu_custom_call.1} parent=11 // pred_check_branch
          %190 = sbr.rel (%p188) target = $region16
        $region15: #{tpu_custom_call.1} parent=11 // pred_region
          %s191 = smul.u32 64, %s28
          %s193 = ssub.s32 4096, 4096
          %194 = vsyncadd [#allocation7], %s193
          %s195 = smul.addr %s191, 64
          %s196 = scalar_lea.hbm %s1, %s195
          %s197 = sshll.u32 [#allocation6], 4
          %s198 = int_to_ptr.vmem [resolvable:$true] %s197
          %203 = dma.hbm_to_vmem [thread:$0]  %s196, 4096, %s198, [#allocation7], 64, 64, 4
        $region16: #{tpu_custom_call.1} parent=11 // pred_fallthru
          _
        // Predicated region
        $region17: #{tpu_custom_call.1} parent=11 // pred_check
          %p204 = pneg %p105
        $region18: #{tpu_custom_call.1} parent=11 // pred_check_branch
          %206 = sbr.rel (%p204) target = $region20
        $region19: #{tpu_custom_call.1} parent=11 // pred_region
          _
        $region20: #{tpu_custom_call.1} parent=11 // pred_fallthru
          _
        // Predicated region
        $region21: #{tpu_custom_call.1} parent=11 // pred_check
          %p207 = pneg %p126
        $region22: #{tpu_custom_call.1} parent=11 // pred_check_branch
          %209 = sbr.rel (%p207) target = $region24
        $region23: #{tpu_custom_call.1} parent=11 // pred_region
          %s211 = ssub.s32 2048, 2048
          %212 = vsyncadd [#allocation7], %s211
          %s213 = sshll.u32 [#allocation8], 4
          %s214 = int_to_ptr.vmem [resolvable:$true] %s213
          %219 = dma.hbm_to_vmem [thread:$0]  %s3, 2048, %s214, [#allocation7], 128, 128, 8
        $region24: #{tpu_custom_call.1} parent=11 // pred_fallthru
          _
        // Predicated region
        $region25: #{tpu_custom_call.1} parent=11 // pred_check
          %p220 = pneg %p147
        $region26: #{tpu_custom_call.1} parent=11 // pred_check_branch
          %222 = sbr.rel (%p220) target = $region28
        $region27: #{tpu_custom_call.1} parent=11 // pred_region
          _
        $region28: #{tpu_custom_call.1} parent=11 // pred_fallthru
          _
      $region12: #{tpu_custom_call.1} parent=5 // pred_fallthru
        _
      %p223 = scmp.lt.s32.totalorder %s18, 2
      // Predicated region
      $region29: #{tpu_custom_call.1} parent=5 // pred_check
        %p224 = pneg %p223
      $region30: #{tpu_custom_call.1} parent=5 // pred_check_branch
        %226 = sbr.rel (%p224) target = $region32
      $region31: #{tpu_custom_call.1} parent=5 // pred_region
        // Predicated region
        $region33: #{tpu_custom_call.1} parent=31 // pred_check
          %p227 = pneg %p52
        $region34: #{tpu_custom_call.1} parent=31 // pred_check_branch
          %229 = sbr.rel (%p227) target = $region36
        $region35: #{tpu_custom_call.1} parent=31 // pred_region
          %s230 = sand.u32 %s42, 1
          %s231 = scalar_lea.sflag [#allocation4], %s230
          %s232 = sand.u32 %s42, 1
          %s233 = smul.addr %s232, 128
          %s234 = scalar_lea.vmem [#allocation3], %s233
          %s235 = smul.u32 8, %s25
          %s236 = smul.u32 4, %s26
          %s238 = ssub.s32 2048, 2048
          %239 = vsyncadd %s231, %s238
          %s240 = smul.addr %s235, 4
          %s241 = sadd.s32 %s236, %s240
          %s242 = smul.addr %s241, 64
          %s243 = scalar_lea.hbm %s0, %s242
          %s244 = sshll.u32 %s234, 4
          %s245 = int_to_ptr.vmem [resolvable:$true] %s244
          %250 = dma.hbm_to_vmem [thread:$0]  %s243, 2048, %s245, %s231, 256, 256, 16
        $region36: #{tpu_custom_call.1} parent=31 // pred_fallthru
          _
      $region32: #{tpu_custom_call.1} parent=5 // pred_fallthru
        _
      %p251 = scmp.le.s32.totalorder 1, %s18
      %p252 = scmp.lt.s32.totalorder %s18, 3
      %p253 = pnand %p251, %p252
      %p254 = pneg %p253
      // Predicated region
      $region37: #{tpu_custom_call.1} parent=5 // pred_check
        _
      $region38: #{tpu_custom_call.1} parent=5 // pred_check_branch
        %256 = sbr.rel (%p253) target = $region40
      $region39: #{tpu_custom_call.1} parent=5 // pred_region
        %s257 = ssub.s32 %s18, 1
        %s258 = sand.u32 %s45, 1
        %s259 = scalar_lea.sflag [#allocation4], %s258
        %s260 = sand.u32 %s45, 1
        %s261 = smul.addr %s260, 128
        %s262 = scalar_lea.vmem [#allocation3], %s261
        // Predicated region
        $region41: #{tpu_custom_call.1} parent=39 // pred_check
          %p263 = pneg %p58
        $region42: #{tpu_custom_call.1} parent=39 // pred_check_branch
          %265 = sbr.rel (%p263) target = $region44
        $region43: #{tpu_custom_call.1} parent=39 // pred_region
          %266 = dma.done %s259, 2048
        $region44: #{tpu_custom_call.1} parent=39 // pred_fallthru
          _
        // Predicated region
        $region45: #{tpu_custom_call.1} parent=39 // pred_check
          %p267 = pneg %p84
        $region46: #{tpu_custom_call.1} parent=39 // pred_check_branch
          %269 = sbr.rel (%p267) target = $region48
        $region47: #{tpu_custom_call.1} parent=39 // pred_region
          %270 = dma.done [#allocation7], 4096
        $region48: #{tpu_custom_call.1} parent=39 // pred_fallthru
          _
        // Predicated region
        $region49: #{tpu_custom_call.1} parent=39 // pred_check
          %p271 = pneg %p126
        $region50: #{tpu_custom_call.1} parent=39 // pred_check_branch
          %273 = sbr.rel (%p271) target = $region52
        $region51: #{tpu_custom_call.1} parent=39 // pred_region
          %274 = dma.done [#allocation7], 2048
        $region52: #{tpu_custom_call.1} parent=39 // pred_fallthru
          _
        %s275 = sand.u32 %s45, 1
        %s276 = scalar_lea.sflag [#allocation4], %s275
        %s277 = sand.u32 %s45, 1
        %s278 = smul.addr %s277, 128
        %s279 = scalar_lea.vmem [#allocation3], %s278
        %p280 = pneg %p58
        %p281 = pneg %p55
        %p282 = pneg %p84
        %p283 = pneg %p81
        %p284 = pneg %p105
        %p285 = pneg %p102
        %p286 = pneg %p126
        %p287 = pneg %p123
        %p288 = pneg %p147
        %p289 = pneg %p144
        %p290 = pneg %p173
        %p291 = pneg %p170
        %s292 = sand.u32 %s160, 1
        %s293 = scalar_lea.sflag [#allocation5], %s292
        %s294 = sand.u32 %s160, 1
        %s295 = smul.addr %s294, 64
        %s296 = scalar_lea.vmem [#allocation9], %s295
        %s297 = smul.u32 8, %s27
        %s298 = smul.u32 4, %s28
        %s299 = smul.u32 64, %s28
        %s300 = smul.u32 8, %s27
        %p302 = scmp.eq.s32.totalorder %s28, 0
        // Predicated region
        $region53: #{tpu_custom_call.1} parent=39 // pred_check
          %p303 = pneg %p302
        $region54: #{tpu_custom_call.1} parent=39 // pred_check_branch
          %305 = sbr.rel (%p303) target = $region56
        $region55: #{tpu_custom_call.1} parent=39 // pred_region
          %306 = vst [vmem:[#allocation2] sm:$0xff] 0.0
          %307 = vst [vmem:[#allocation2 + $0x8] sm:$0xff] 0.0
          %308 = vst [vmem:[#allocation2 + $0x10] sm:$0xff] 0.0
          %309 = vst [vmem:[#allocation2 + $0x18] sm:$0xff] 0.0
          %310 = vst [vmem:[#allocation2 + $0x20] sm:$0xff] 0.0
          %311 = vst [vmem:[#allocation2 + $0x28] sm:$0xff] 0.0
          %312 = vst [vmem:[#allocation2 + $0x30] sm:$0xff] 0.0
          %313 = vst [vmem:[#allocation2 + $0x38] sm:$0xff] 0.0
        $region56: #{tpu_custom_call.1} parent=39 // pred_fallthru
          _
        %v314 = vld [vmem:[%s262] sm:$0xff]
        %v315 = vld [vmem:[%s262 + $0x8] sm:$0xff]
        %v316 = vld [vmem:[%s262 + $0x10] sm:$0xff]
        %v317 = vld [vmem:[%s262 + $0x18] sm:$0xff]
        %v318 = vld [vmem:[%s262 + $0x20] sm:$0xff]
        %v319 = vld [vmem:[%s262 + $0x28] sm:$0xff]
        %v320 = vld [vmem:[%s262 + $0x30] sm:$0xff]
        %v321 = vld [vmem:[%s262 + $0x38] sm:$0xff]
        %v322 = vld [vmem:[%s262 + $0x40] sm:$0xff]
        %v323 = vld [vmem:[%s262 + $0x48] sm:$0xff]
        %v324 = vld [vmem:[%s262 + $0x50] sm:$0xff]
        %v325 = vld [vmem:[%s262 + $0x58] sm:$0xff]
        %v326 = vld [vmem:[%s262 + $0x60] sm:$0xff]
        %v327 = vld [vmem:[%s262 + $0x68] sm:$0xff]
        %v328 = vld [vmem:[%s262 + $0x70] sm:$0xff]
        %v329 = vld [vmem:[%s262 + $0x78] sm:$0xff]
        %v330 = vunpack.c.l.bf16 %v314
        %v331 = vunpack.c.h.bf16 %v314
        %v332 = vunpack.c.l.bf16 %v315
        %v333 = vunpack.c.h.bf16 %v315
        %v334 = vunpack.c.l.bf16 %v316
        %v335 = vunpack.c.h.bf16 %v316
        %v336 = vunpack.c.l.bf16 %v317
        %v337 = vunpack.c.h.bf16 %v317
        %v338 = vunpack.c.l.bf16 %v318
        %v339 = vunpack.c.h.bf16 %v318
        %v340 = vunpack.c.l.bf16 %v319
        %v341 = vunpack.c.h.bf16 %v319
        %v342 = vunpack.c.l.bf16 %v320
        %v343 = vunpack.c.h.bf16 %v320
        %v344 = vunpack.c.l.bf16 %v321
        %v345 = vunpack.c.h.bf16 %v321
        %v346 = vunpack.c.l.bf16 %v322
        %v347 = vunpack.c.h.bf16 %v322
        %v348 = vunpack.c.l.bf16 %v323
        %v349 = vunpack.c.h.bf16 %v323
        %v350 = vunpack.c.l.bf16 %v324
        %v351 = vunpack.c.h.bf16 %v324
        %v352 = vunpack.c.l.bf16 %v325
        %v353 = vunpack.c.h.bf16 %v325
        %v354 = vunpack.c.l.bf16 %v326
        %v355 = vunpack.c.h.bf16 %v326
        %v356 = vunpack.c.l.bf16 %v327
        %v357 = vunpack.c.h.bf16 %v327
        %v358 = vunpack.c.l.bf16 %v328
        %v359 = vunpack.c.h.bf16 %v328
        %v360 = vunpack.c.l.bf16 %v329
        %v361 = vunpack.c.h.bf16 %v329
        %v362 = vmul.f32 %v330, %v330
        %v363 = vmul.f32 %v331, %v331
        %v364 = vmul.f32 %v332, %v332
        %v365 = vmul.f32 %v333, %v333
        %v366 = vmul.f32 %v334, %v334
        %v367 = vmul.f32 %v335, %v335
        %v368 = vmul.f32 %v336, %v336
        %v369 = vmul.f32 %v337, %v337
        %v370 = vmul.f32 %v338, %v338
        %v371 = vmul.f32 %v339, %v339
        %v372 = vmul.f32 %v340, %v340
        %v373 = vmul.f32 %v341, %v341
        %v374 = vmul.f32 %v342, %v342
        %v375 = vmul.f32 %v343, %v343
        %v376 = vmul.f32 %v344, %v344
        %v377 = vmul.f32 %v345, %v345
        %v378 = vmul.f32 %v346, %v346
        %v379 = vmul.f32 %v347, %v347
        %v380 = vmul.f32 %v348, %v348
        %v381 = vmul.f32 %v349, %v349
        %v382 = vmul.f32 %v350, %v350
        %v383 = vmul.f32 %v351, %v351
        %v384 = vmul.f32 %v352, %v352
        %v385 = vmul.f32 %v353, %v353
        %v386 = vmul.f32 %v354, %v354
        %v387 = vmul.f32 %v355, %v355
        %v388 = vmul.f32 %v356, %v356
        %v389 = vmul.f32 %v357, %v357
        %v390 = vmul.f32 %v358, %v358
        %v391 = vmul.f32 %v359, %v359
        %v392 = vmul.f32 %v360, %v360
        %v393 = vmul.f32 %v361, %v361
        %v394 = vrot.slane %v362, 4
        %v395 = vadd.f32 %v362, %v394
        %v396 = vrot.slane %v395, 2
        %v397 = vadd.f32 %v395, %v396
        %v398 = vrot.slane %v397, 1
        %v399 = vadd.f32 %v397, %v398
        %v400 = vrot.slane %v363, 4
        %v401 = vadd.f32 %v363, %v400
        %v402 = vrot.slane %v401, 2
        %v403 = vadd.f32 %v401, %v402
        %v404 = vrot.slane %v403, 1
        %v405 = vadd.f32 %v403, %v404
        %v406 = vrot.slane %v364, 4
        %v407 = vadd.f32 %v364, %v406
        %v408 = vrot.slane %v407, 2
        %v409 = vadd.f32 %v407, %v408
        %v410 = vrot.slane %v409, 1
        %v411 = vadd.f32 %v409, %v410
        %v412 = vrot.slane %v365, 4
        %v413 = vadd.f32 %v365, %v412
        %v414 = vrot.slane %v413, 2
        %v415 = vadd.f32 %v413, %v414
        %v416 = vrot.slane %v415, 1
        %v417 = vadd.f32 %v415, %v416
        %v418 = vrot.slane %v366, 4
        %v419 = vadd.f32 %v366, %v418
        %v420 = vrot.slane %v419, 2
        %v421 = vadd.f32 %v419, %v420
        %v422 = vrot.slane %v421, 1
        %v423 = vadd.f32 %v421, %v422
        %v424 = vrot.slane %v367, 4
        %v425 = vadd.f32 %v367, %v424
        %v426 = vrot.slane %v425, 2
        %v427 = vadd.f32 %v425, %v426
        %v428 = vrot.slane %v427, 1
        %v429 = vadd.f32 %v427, %v428
        %v430 = vrot.slane %v368, 4
        %v431 = vadd.f32 %v368, %v430
        %v432 = vrot.slane %v431, 2
        %v433 = vadd.f32 %v431, %v432
        %v434 = vrot.slane %v433, 1
        %v435 = vadd.f32 %v433, %v434
        %v436 = vrot.slane %v369, 4
        %v437 = vadd.f32 %v369, %v436
        %v438 = vrot.slane %v437, 2
        %v439 = vadd.f32 %v437, %v438
        %v440 = vrot.slane %v439, 1
        %v441 = vadd.f32 %v439, %v440
        %v442 = vrot.slane %v370, 4
        %v443 = vadd.f32 %v370, %v442
        %v444 = vrot.slane %v443, 2
        %v445 = vadd.f32 %v443, %v444
        %v446 = vrot.slane %v445, 1
        %v447 = vadd.f32 %v445, %v446
        %v448 = vrot.slane %v371, 4
        %v449 = vadd.f32 %v371, %v448
        %v450 = vrot.slane %v449, 2
        %v451 = vadd.f32 %v449, %v450
        %v452 = vrot.slane %v451, 1
        %v453 = vadd.f32 %v451, %v452
        %v454 = vrot.slane %v372, 4
        %v455 = vadd.f32 %v372, %v454
        %v456 = vrot.slane %v455, 2
        %v457 = vadd.f32 %v455, %v456
        %v458 = vrot.slane %v457, 1
        %v459 = vadd.f32 %v457, %v458
        %v460 = vrot.slane %v373, 4
        %v461 = vadd.f32 %v373, %v460
        %v462 = vrot.slane %v461, 2
        %v463 = vadd.f32 %v461, %v462
        %v464 = vrot.slane %v463, 1
        %v465 = vadd.f32 %v463, %v464
        %v466 = vrot.slane %v374, 4
        %v467 = vadd.f32 %v374, %v466
        %v468 = vrot.slane %v467, 2
        %v469 = vadd.f32 %v467, %v468
        %v470 = vrot.slane %v469, 1
        %v471 = vadd.f32 %v469, %v470
        %v472 = vrot.slane %v375, 4
        %v473 = vadd.f32 %v375, %v472
        %v474 = vrot.slane %v473, 2
        %v475 = vadd.f32 %v473, %v474
        %v476 = vrot.slane %v475, 1
        %v477 = vadd.f32 %v475, %v476
        %v478 = vrot.slane %v376, 4
        %v479 = vadd.f32 %v376, %v478
        %v480 = vrot.slane %v479, 2
        %v481 = vadd.f32 %v479, %v480
        %v482 = vrot.slane %v481, 1
        %v483 = vadd.f32 %v481, %v482
        %v484 = vrot.slane %v377, 4
        %v485 = vadd.f32 %v377, %v484
        %v486 = vrot.slane %v485, 2
        %v487 = vadd.f32 %v485, %v486
        %v488 = vrot.slane %v487, 1
        %v489 = vadd.f32 %v487, %v488
        %v490 = vrot.slane %v378, 4
        %v491 = vadd.f32 %v378, %v490
        %v492 = vrot.slane %v491, 2
        %v493 = vadd.f32 %v491, %v492
        %v494 = vrot.slane %v493, 1
        %v495 = vadd.f32 %v493, %v494
        %v496 = vrot.slane %v379, 4
        %v497 = vadd.f32 %v379, %v496
        %v498 = vrot.slane %v497, 2
        %v499 = vadd.f32 %v497, %v498
        %v500 = vrot.slane %v499, 1
        %v501 = vadd.f32 %v499, %v500
        %v502 = vrot.slane %v380, 4
        %v503 = vadd.f32 %v380, %v502
        %v504 = vrot.slane %v503, 2
        %v505 = vadd.f32 %v503, %v504
        %v506 = vrot.slane %v505, 1
        %v507 = vadd.f32 %v505, %v506
        %v508 = vrot.slane %v381, 4
        %v509 = vadd.f32 %v381, %v508
        %v510 = vrot.slane %v509, 2
        %v511 = vadd.f32 %v509, %v510
        %v512 = vrot.slane %v511, 1
        %v513 = vadd.f32 %v511, %v512
        %v514 = vrot.slane %v382, 4
        %v515 = vadd.f32 %v382, %v514
        %v516 = vrot.slane %v515, 2
        %v517 = vadd.f32 %v515, %v516
        %v518 = vrot.slane %v517, 1
        %v519 = vadd.f32 %v517, %v518
        %v520 = vrot.slane %v383, 4
        %v521 = vadd.f32 %v383, %v520
        %v522 = vrot.slane %v521, 2
        %v523 = vadd.f32 %v521, %v522
        %v524 = vrot.slane %v523, 1
        %v525 = vadd.f32 %v523, %v524
        %v526 = vrot.slane %v384, 4
        %v527 = vadd.f32 %v384, %v526
        %v528 = vrot.slane %v527, 2
        %v529 = vadd.f32 %v527, %v528
        %v530 = vrot.slane %v529, 1
        %v531 = vadd.f32 %v529, %v530
        %v532 = vrot.slane %v385, 4
        %v533 = vadd.f32 %v385, %v532
        %v534 = vrot.slane %v533, 2
        %v535 = vadd.f32 %v533, %v534
        %v536 = vrot.slane %v535, 1
        %v537 = vadd.f32 %v535, %v536
        %v538 = vrot.slane %v386, 4
        %v539 = vadd.f32 %v386, %v538
        %v540 = vrot.slane %v539, 2
        %v541 = vadd.f32 %v539, %v540
        %v542 = vrot.slane %v541, 1
        %v543 = vadd.f32 %v541, %v542
        %v544 = vrot.slane %v387, 4
        %v545 = vadd.f32 %v387, %v544
        %v546 = vrot.slane %v545, 2
        %v547 = vadd.f32 %v545, %v546
        %v548 = vrot.slane %v547, 1
        %v549 = vadd.f32 %v547, %v548
        %v550 = vrot.slane %v388, 4
        %v551 = vadd.f32 %v388, %v550
        %v552 = vrot.slane %v551, 2
        %v553 = vadd.f32 %v551, %v552
        %v554 = vrot.slane %v553, 1
        %v555 = vadd.f32 %v553, %v554
        %v556 = vrot.slane %v389, 4
        %v557 = vadd.f32 %v389, %v556
        %v558 = vrot.slane %v557, 2
        %v559 = vadd.f32 %v557, %v558
        %v560 = vrot.slane %v559, 1
        %v561 = vadd.f32 %v559, %v560
        %v562 = vrot.slane %v390, 4
        %v563 = vadd.f32 %v390, %v562
        %v564 = vrot.slane %v563, 2
        %v565 = vadd.f32 %v563, %v564
        %v566 = vrot.slane %v565, 1
        %v567 = vadd.f32 %v565, %v566
        %v568 = vrot.slane %v391, 4
        %v569 = vadd.f32 %v391, %v568
        %v570 = vrot.slane %v569, 2
        %v571 = vadd.f32 %v569, %v570
        %v572 = vrot.slane %v571, 1
        %v573 = vadd.f32 %v571, %v572
        %v574 = vrot.slane %v392, 4
        %v575 = vadd.f32 %v392, %v574
        %v576 = vrot.slane %v575, 2
        %v577 = vadd.f32 %v575, %v576
        %v578 = vrot.slane %v577, 1
        %v579 = vadd.f32 %v577, %v578
        %v580 = vrot.slane %v393, 4
        %v581 = vadd.f32 %v393, %v580
        %v582 = vrot.slane %v581, 2
        %v583 = vadd.f32 %v581, %v582
        %v584 = vrot.slane %v583, 1
        %v585 = vadd.f32 %v583, %v584
        %v586 = vmax.f32 %v399, 1e-24
        %v587 = vmax.f32 %v405, 1e-24
        %v588 = vmax.f32 %v411, 1e-24
        %v589 = vmax.f32 %v417, 1e-24
        %v590 = vmax.f32 %v423, 1e-24
        %v591 = vmax.f32 %v429, 1e-24
        %v592 = vmax.f32 %v435, 1e-24
        %v593 = vmax.f32 %v441, 1e-24
        %v594 = vmax.f32 %v447, 1e-24
        %v595 = vmax.f32 %v453, 1e-24
        %v596 = vmax.f32 %v459, 1e-24
        %v597 = vmax.f32 %v465, 1e-24
        %v598 = vmax.f32 %v471, 1e-24
        %v599 = vmax.f32 %v477, 1e-24
        %v600 = vmax.f32 %v483, 1e-24
        %v601 = vmax.f32 %v489, 1e-24
        %v602 = vmax.f32 %v495, 1e-24
        %v603 = vmax.f32 %v501, 1e-24
        %v604 = vmax.f32 %v507, 1e-24
        %v605 = vmax.f32 %v513, 1e-24
        %v606 = vmax.f32 %v519, 1e-24
        %v607 = vmax.f32 %v525, 1e-24
        %v608 = vmax.f32 %v531, 1e-24
        %v609 = vmax.f32 %v537, 1e-24
        %v610 = vmax.f32 %v543, 1e-24
        %v611 = vmax.f32 %v549, 1e-24
        %v612 = vmax.f32 %v555, 1e-24
        %v613 = vmax.f32 %v561, 1e-24
        %v614 = vmax.f32 %v567, 1e-24
        %v615 = vmax.f32 %v573, 1e-24
        %v616 = vmax.f32 %v579, 1e-24
        %v617 = vmax.f32 %v585, 1e-24
        %v618 = vrsqrt.pop %v586
        %v619 = vrsqrt.pop %v587
        %v620 = vrsqrt.pop %v588
        %v621 = vrsqrt.pop %v589
        %v622 = vrsqrt.pop %v590
        %v623 = vrsqrt.pop %v591
        %v624 = vrsqrt.pop %v592
        %v625 = vrsqrt.pop %v593
        %v626 = vrsqrt.pop %v594
        %v627 = vrsqrt.pop %v595
        %v628 = vrsqrt.pop %v596
        %v629 = vrsqrt.pop %v597
        %v630 = vrsqrt.pop %v598
        %v631 = vrsqrt.pop %v599
        %v632 = vrsqrt.pop %v600
        %v633 = vrsqrt.pop %v601
        %v634 = vrsqrt.pop %v602
        %v635 = vrsqrt.pop %v603
        %v636 = vrsqrt.pop %v604
        %v637 = vrsqrt.pop %v605
        %v638 = vrsqrt.pop %v606
        %v639 = vrsqrt.pop %v607
        %v640 = vrsqrt.pop %v608
        %v641 = vrsqrt.pop %v609
        %v642 = vrsqrt.pop %v610
        %v643 = vrsqrt.pop %v611
        %v644 = vrsqrt.pop %v612
        %v645 = vrsqrt.pop %v613
        %v646 = vrsqrt.pop %v614
        %v647 = vrsqrt.pop %v615
        %v648 = vrsqrt.pop %v616
        %v649 = vrsqrt.pop %v617
        %v650 = vmul.f32 %v330, %v618
        %v651 = vmul.f32 %v331, %v619
        %v652 = vmul.f32 %v332, %v620
        %v653 = vmul.f32 %v333, %v621
        %v654 = vmul.f32 %v334, %v622
        %v655 = vmul.f32 %v335, %v623
        %v656 = vmul.f32 %v336, %v624
        %v657 = vmul.f32 %v337, %v625
        %v658 = vmul.f32 %v338, %v626
        %v659 = vmul.f32 %v339, %v627
        %v660 = vmul.f32 %v340, %v628
        %v661 = vmul.f32 %v341, %v629
        %v662 = vmul.f32 %v342, %v630
        %v663 = vmul.f32 %v343, %v631
        %v664 = vmul.f32 %v344, %v632
        %v665 = vmul.f32 %v345, %v633
        %v666 = vmul.f32 %v346, %v634
        %v667 = vmul.f32 %v347, %v635
        %v668 = vmul.f32 %v348, %v636
        %v669 = vmul.f32 %v349, %v637
        %v670 = vmul.f32 %v350, %v638
        %v671 = vmul.f32 %v351, %v639
        %v672 = vmul.f32 %v352, %v640
        %v673 = vmul.f32 %v353, %v641
        %v674 = vmul.f32 %v354, %v642
        %v675 = vmul.f32 %v355, %v643
        %v676 = vmul.f32 %v356, %v644
        %v677 = vmul.f32 %v357, %v645
        %v678 = vmul.f32 %v358, %v646
        %v679 = vmul.f32 %v359, %v647
        %v680 = vmul.f32 %v360, %v648
        %v681 = vmul.f32 %v361, %v649
        %v682 = vpack.c.bf16 %v654, %v650
        %v683 = vpack.c.bf16 %v655, %v651
        %v684 = vpack.c.bf16 %v656, %v652
        %v685 = vpack.c.bf16 %v657, %v653
        %v686 = vpack.c.bf16 %v662, %v658
        %v687 = vpack.c.bf16 %v663, %v659
        %v688 = vpack.c.bf16 %v664, %v660
        %v689 = vpack.c.bf16 %v665, %v661
        %v690 = vpack.c.bf16 %v670, %v666
        %v691 = vpack.c.bf16 %v671, %v667
        %v692 = vpack.c.bf16 %v672, %v668
        %v693 = vpack.c.bf16 %v673, %v669
        %v694 = vpack.c.bf16 %v678, %v674
        %v695 = vpack.c.bf16 %v679, %v675
        %v696 = vpack.c.bf16 %v680, %v676
        %v697 = vpack.c.bf16 %v681, %v677
        %v698 = vld [vmem:[#allocation6] sm:$0xf]
        %v699 = vld [vmem:[#allocation6 + $0x4] sm:$0xf]
        %v700 = vld [vmem:[#allocation6 + $0x8] sm:$0xf]
        %v701 = vld [vmem:[#allocation6 + $0xc] sm:$0xf]
        %v702 = vld [vmem:[#allocation6 + $0x10] sm:$0xf]
        %v703 = vld [vmem:[#allocation6 + $0x14] sm:$0xf]
        %v704 = vld [vmem:[#allocation6 + $0x18] sm:$0xf]
        %v705 = vld [vmem:[#allocation6 + $0x1c] sm:$0xf]
        %v706 = vld [vmem:[#allocation6 + $0x20] sm:$0xf]
        %v707 = vld [vmem:[#allocation6 + $0x24] sm:$0xf]
        %v708 = vld [vmem:[#allocation6 + $0x28] sm:$0xf]
        %v709 = vld [vmem:[#allocation6 + $0x2c] sm:$0xf]
        %v710 = vld [vmem:[#allocation6 + $0x30] sm:$0xf]
        %v711 = vld [vmem:[#allocation6 + $0x34] sm:$0xf]
        %v712 = vld [vmem:[#allocation6 + $0x38] sm:$0xf]
        %v713 = vld [vmem:[#allocation6 + $0x3c] sm:$0xf]
        %v714 = vld [vmem:[#allocation6 + $0x40] sm:$0xf]
        %v715 = vld [vmem:[#allocation6 + $0x44] sm:$0xf]
        %v716 = vld [vmem:[#allocation6 + $0x48] sm:$0xf]
        %v717 = vld [vmem:[#allocation6 + $0x4c] sm:$0xf]
        %v718 = vld [vmem:[#allocation6 + $0x50] sm:$0xf]
        %v719 = vld [vmem:[#allocation6 + $0x54] sm:$0xf]
        %v720 = vld [vmem:[#allocation6 + $0x58] sm:$0xf]
        %v721 = vld [vmem:[#allocation6 + $0x5c] sm:$0xf]
        %v722 = vld [vmem:[#allocation6 + $0x60] sm:$0xf]
        %v723 = vld [vmem:[#allocation6 + $0x64] sm:$0xf]
        %v724 = vld [vmem:[#allocation6 + $0x68] sm:$0xf]
        %v725 = vld [vmem:[#allocation6 + $0x6c] sm:$0xf]
        %v726 = vld [vmem:[#allocation6 + $0x70] sm:$0xf]
        %v727 = vld [vmem:[#allocation6 + $0x74] sm:$0xf]
        %v728 = vld [vmem:[#allocation6 + $0x78] sm:$0xf]
        %v729 = vld [vmem:[#allocation6 + $0x7c] sm:$0xf]
        %v730 = vld [vmem:[#allocation6 + $0x80] sm:$0xf]
        %v731 = vld [vmem:[#allocation6 + $0x84] sm:$0xf]
        %v732 = vld [vmem:[#allocation6 + $0x88] sm:$0xf]
        %v733 = vld [vmem:[#allocation6 + $0x8c] sm:$0xf]
        %v734 = vld [vmem:[#allocation6 + $0x90] sm:$0xf]
        %v735 = vld [vmem:[#allocation6 + $0x94] sm:$0xf]
        %v736 = vld [vmem:[#allocation6 + $0x98] sm:$0xf]
        %v737 = vld [vmem:[#allocation6 + $0x9c] sm:$0xf]
        %v738 = vld [vmem:[#allocation6 + $0xa0] sm:$0xf]
        %v739 = vld [vmem:[#allocation6 + $0xa4] sm:$0xf]
        %v740 = vld [vmem:[#allocation6 + $0xa8] sm:$0xf]
        %v741 = vld [vmem:[#allocation6 + $0xac] sm:$0xf]
        %v742 = vld [vmem:[#allocation6 + $0xb0] sm:$0xf]
        %v743 = vld [vmem:[#allocation6 + $0xb4] sm:$0xf]
        %v744 = vld [vmem:[#allocation6 + $0xb8] sm:$0xf]
        %v745 = vld [vmem:[#allocation6 + $0xbc] sm:$0xf]
        %v746 = vld [vmem:[#allocation6 + $0xc0] sm:$0xf]
        %v747 = vld [vmem:[#allocation6 + $0xc4] sm:$0xf]
        %v748 = vld [vmem:[#allocation6 + $0xc8] sm:$0xf]
        %v749 = vld [vmem:[#allocation6 + $0xcc] sm:$0xf]
        %v750 = vld [vmem:[#allocation6 + $0xd0] sm:$0xf]
        %v751 = vld [vmem:[#allocation6 + $0xd4] sm:$0xf]
        %v752 = vld [vmem:[#allocation6 + $0xd8] sm:$0xf]
        %v753 = vld [vmem:[#allocation6 + $0xdc] sm:$0xf]
        %v754 = vld [vmem:[#allocation6 + $0xe0] sm:$0xf]
        %v755 = vld [vmem:[#allocation6 + $0xe4] sm:$0xf]
        %v756 = vld [vmem:[#allocation6 + $0xe8] sm:$0xf]
        %v757 = vld [vmem:[#allocation6 + $0xec] sm:$0xf]
        %v758 = vld [vmem:[#allocation6 + $0xf0] sm:$0xf]
        %v759 = vld [vmem:[#allocation6 + $0xf4] sm:$0xf]
        %v760 = vld [vmem:[#allocation6 + $0xf8] sm:$0xf]
        %v761 = vld [vmem:[#allocation6 + $0xfc] sm:$0xf]
        %v762 = vld [vmem:[#allocation2] sm:$0xff]
        %v763 = vld [vmem:[#allocation2 + $0x8] sm:$0xff]
        %v764 = vld [vmem:[#allocation2 + $0x10] sm:$0xff]
        %v765 = vld [vmem:[#allocation2 + $0x18] sm:$0xff]
        %v766 = vld [vmem:[#allocation2 + $0x20] sm:$0xff]
        %v767 = vld [vmem:[#allocation2 + $0x28] sm:$0xff]
        %v768 = vld [vmem:[#allocation2 + $0x30] sm:$0xff]
        %v769 = vld [vmem:[#allocation2 + $0x38] sm:$0xff]
        %v834 = vunpack.c.l.b16 %v698
        %v835 = vunpack.c.l.b16 %v699
        %v836 = vunpack.c.l.b16 %v700
        %v837 = vunpack.c.l.b16 %v701
        %v838 = vunpack.c.l.b16 %v702
        %v839 = vunpack.c.l.b16 %v703
        %v840 = vunpack.c.l.b16 %v704
        %v841 = vunpack.c.l.b16 %v705
        %v842 = vunpack.c.l.b16 %v706
        %v843 = vunpack.c.l.b16 %v707
        %v844 = vunpack.c.l.b16 %v708
        %v845 = vunpack.c.l.b16 %v709
        %v846 = vunpack.c.l.b16 %v710
        %v847 = vunpack.c.l.b16 %v711
        %v848 = vunpack.c.l.b16 %v712
        %v849 = vunpack.c.l.b16 %v713
        %v850 = vunpack.c.l.b16 %v714
        %v851 = vunpack.c.l.b16 %v715
        %v852 = vunpack.c.l.b16 %v716
        %v853 = vunpack.c.l.b16 %v717
        %v854 = vunpack.c.l.b16 %v718
        %v855 = vunpack.c.l.b16 %v719
        %v856 = vunpack.c.l.b16 %v720
        %v857 = vunpack.c.l.b16 %v721
        %v858 = vunpack.c.l.b16 %v722
        %v859 = vunpack.c.l.b16 %v723
        %v860 = vunpack.c.l.b16 %v724
        %v861 = vunpack.c.l.b16 %v725
        %v862 = vunpack.c.l.b16 %v726
        %v863 = vunpack.c.l.b16 %v727
        %v864 = vunpack.c.l.b16 %v728
        %v865 = vunpack.c.l.b16 %v729
        %v866 = vunpack.c.l.b16 %v730
        %v867 = vunpack.c.l.b16 %v731
        %v868 = vunpack.c.l.b16 %v732
        %v869 = vunpack.c.l.b16 %v733
        %v870 = vunpack.c.l.b16 %v734
        %v871 = vunpack.c.l.b16 %v735
        %v872 = vunpack.c.l.b16 %v736
        %v873 = vunpack.c.l.b16 %v737
        %v874 = vunpack.c.l.b16 %v738
        %v875 = vunpack.c.l.b16 %v739
        %v876 = vunpack.c.l.b16 %v740
        %v877 = vunpack.c.l.b16 %v741
        %v878 = vunpack.c.l.b16 %v742
        %v879 = vunpack.c.l.b16 %v743
        %v880 = vunpack.c.l.b16 %v744
        %v881 = vunpack.c.l.b16 %v745
        %v882 = vunpack.c.l.b16 %v746
        %v883 = vunpack.c.l.b16 %v747
        %v884 = vunpack.c.l.b16 %v748
        %v885 = vunpack.c.l.b16 %v749
        %v886 = vunpack.c.l.b16 %v750
        %v887 = vunpack.c.l.b16 %v751
        %v888 = vunpack.c.l.b16 %v752
        %v889 = vunpack.c.l.b16 %v753
        %v890 = vunpack.c.l.b16 %v754
        %v891 = vunpack.c.l.b16 %v755
        %v892 = vunpack.c.l.b16 %v756
        %v893 = vunpack.c.l.b16 %v757
        %v894 = vunpack.c.l.b16 %v758
        %v895 = vunpack.c.l.b16 %v759
        %v896 = vunpack.c.l.b16 %v760
        %v897 = vunpack.c.l.b16 %v761
        %v898 = vpack.c.b16 %v835, %v834
        %v899 = vpack.c.b16 %v837, %v836
        %v900 = vpack.c.b16 %v839, %v838
        %v901 = vpack.c.b16 %v841, %v840
        %v902 = vpack.c.b16 %v843, %v842
        %v903 = vpack.c.b16 %v845, %v844
        %v904 = vpack.c.b16 %v847, %v846
        %v905 = vpack.c.b16 %v849, %v848
        %v906 = vpack.c.b16 %v851, %v850
        %v907 = vpack.c.b16 %v853, %v852
        %v908 = vpack.c.b16 %v855, %v854
        %v909 = vpack.c.b16 %v857, %v856
        %v910 = vpack.c.b16 %v859, %v858
        %v911 = vpack.c.b16 %v861, %v860
        %v912 = vpack.c.b16 %v863, %v862
        %v913 = vpack.c.b16 %v865, %v864
        %v914 = vpack.c.b16 %v867, %v866
        %v915 = vpack.c.b16 %v869, %v868
        %v916 = vpack.c.b16 %v871, %v870
        %v917 = vpack.c.b16 %v873, %v872
        %v918 = vpack.c.b16 %v875, %v874
        %v919 = vpack.c.b16 %v877, %v876
        %v920 = vpack.c.b16 %v879, %v878
        %v921 = vpack.c.b16 %v881, %v880
        %v922 = vpack.c.b16 %v883, %v882
        %v923 = vpack.c.b16 %v885, %v884
        %v924 = vpack.c.b16 %v887, %v886
        %v925 = vpack.c.b16 %v889, %v888
        %v926 = vpack.c.b16 %v891, %v890
        %v927 = vpack.c.b16 %v893, %v892
        %v928 = vpack.c.b16 %v895, %v894
        %v929 = vpack.c.b16 %v897, %v896
        %962 = vmatprep.subr.bf16.mxu0 0
        %963 = vmatpush1.bf16.msra.mxu0 %v898
        %964 = vmatprep.subr.bf16.mxu0 0
        %965 = vmatpush1.bf16.msra.mxu0 %v899
        %966 = vmatprep.subr.bf16.mxu0 0
        %967 = vmatpush1.bf16.msra.mxu0 %v900
        %968 = vmatprep.subr.bf16.mxu0 0
        %969 = vmatpush1.bf16.msra.mxu0 %v901
        %970 = vmatprep.subr.bf16.mxu0 0
        %971 = vmatpush1.bf16.msra.mxu0 %v902
        %972 = vmatprep.subr.bf16.mxu0 0
        %973 = vmatpush1.bf16.msra.mxu0 %v903
        %974 = vmatprep.subr.bf16.mxu0 0
        %975 = vmatpush1.bf16.msra.mxu0 %v904
        %976 = vmatprep.subr.bf16.mxu0 0
        %977 = vmatpush1.bf16.msra.mxu0 %v905
        %978 = vmatprep.subr.bf16.mxu0 0
        %979 = vmatpush1.bf16.msra.mxu0 %v906
        %980 = vmatprep.subr.bf16.mxu0 0
        %981 = vmatpush1.bf16.msra.mxu0 %v907
        %982 = vmatprep.subr.bf16.mxu0 0
        %983 = vmatpush1.bf16.msra.mxu0 %v908
        %984 = vmatprep.subr.bf16.mxu0 0
        %985 = vmatpush1.bf16.msra.mxu0 %v909
        %986 = vmatprep.subr.bf16.mxu0 0
        %987 = vmatpush1.bf16.msra.mxu0 %v910
        %988 = vmatprep.subr.bf16.mxu0 0
        %989 = vmatpush1.bf16.msra.mxu0 %v911
        %990 = vmatprep.subr.bf16.mxu0 0
        %991 = vmatpush1.bf16.msra.mxu0 %v912
        %992 = vmatprep.subr.bf16.mxu0 0
        %993 = vmatpush1.bf16.msra.mxu0 %v913
        %994 = vmatprep.mubr.bf16.mxu0 %v683
        %995 = vmatmul.mubr.bf16.gmra.mrb[0].mxu0 %v682
        %v996 = vpop.f32.mrb[0].mxu0
        %v997 = vadd.f32 0.0, %v996
        %v998 = vpop.f32.mrb[0].mxu0
        %v999 = vpop.f32.mrb[0].mxu0
        %v1000 = vadd.f32 0.0, %v999
        %v1001 = vpop.f32.mrb[0].mxu0
        %1002 = vmatprep.mubr.bf16.mxu0 %v687
        %1003 = vmatmul.mubr.bf16.gmra.mrb[0].mxu0 %v686
        %v1004 = vpop.f32.mrb[0].mxu0
        %v1005 = vadd.f32 0.0, %v1004
        %v1006 = vpop.f32.mrb[0].mxu0
        %v1007 = vpop.f32.mrb[0].mxu0
        %v1008 = vadd.f32 0.0, %v1007
        %v1009 = vpop.f32.mrb[0].mxu0
        %1010 = vmatprep.mubr.bf16.mxu0 %v691
        %1011 = vmatmul.mubr.bf16.gmra.mrb[0].mxu0 %v690
        %v1012 = vpop.f32.mrb[0].mxu0
        %v1013 = vadd.f32 0.0, %v1012
        %v1014 = vpop.f32.mrb[0].mxu0
        %v1015 = vpop.f32.mrb[0].mxu0
        %v1016 = vadd.f32 0.0, %v1015
        %v1017 = vpop.f32.mrb[0].mxu0
        %1018 = vmatprep.mubr.bf16.mxu0 %v695
        %1019 = vmatmul.mubr.bf16.gmra.mrb[0].mxu0 %v694
        %v1020 = vpop.f32.mrb[0].mxu0
        %v1021 = vadd.f32 0.0, %v1020
        %v1022 = vpop.f32.mrb[0].mxu0
        %v1023 = vpop.f32.mrb[0].mxu0
        %v1024 = vadd.f32 0.0, %v1023
        %v1025 = vpop.f32.mrb[0].mxu0
        %1026 = vdwg.mxu0
        %1027 = vmatprep.subr.bf16.mxu0 0
        %1028 = vmatpush1.bf16.msra.mxu0 %v914
        %1029 = vmatprep.subr.bf16.mxu0 0
        %1030 = vmatpush1.bf16.msra.mxu0 %v915
        %1031 = vmatprep.subr.bf16.mxu0 0
        %1032 = vmatpush1.bf16.msra.mxu0 %v916
        %1033 = vmatprep.subr.bf16.mxu0 0
        %1034 = vmatpush1.bf16.msra.mxu0 %v917
        %1035 = vmatprep.subr.bf16.mxu0 0
        %1036 = vmatpush1.bf16.msra.mxu0 %v918
        %1037 = vmatprep.subr.bf16.mxu0 0
        %1038 = vmatpush1.bf16.msra.mxu0 %v919
        %1039 = vmatprep.subr.bf16.mxu0 0
        %1040 = vmatpush1.bf16.msra.mxu0 %v920
        %1041 = vmatprep.subr.bf16.mxu0 0
        %1042 = vmatpush1.bf16.msra.mxu0 %v921
        %1043 = vmatprep.subr.bf16.mxu0 0
        %1044 = vmatpush1.bf16.msra.mxu0 %v922
        %1045 = vmatprep.subr.bf16.mxu0 0
        %1046 = vmatpush1.bf16.msra.mxu0 %v923
        %1047 = vmatprep.subr.bf16.mxu0 0
        %1048 = vmatpush1.bf16.msra.mxu0 %v924
        %1049 = vmatprep.subr.bf16.mxu0 0
        %1050 = vmatpush1.bf16.msra.mxu0 %v925
        %1051 = vmatprep.subr.bf16.mxu0 0
        %1052 = vmatpush1.bf16.msra.mxu0 %v926
        %1053 = vmatprep.subr.bf16.mxu0 0
        %1054 = vmatpush1.bf16.msra.mxu0 %v927
        %1055 = vmatprep.subr.bf16.mxu0 0
        %1056 = vmatpush1.bf16.msra.mxu0 %v928
        %1057 = vmatprep.subr.bf16.mxu0 0
        %1058 = vmatpush1.bf16.msra.mxu0 %v929
        %1059 = vmatprep.mubr.bf16.mxu0 %v685
        %1060 = vmatmul.mubr.bf16.gmra.mrb[0].mxu0 %v684
        %v1061 = vpop.f32.mrb[0].mxu0
        %v1062 = vadd.f32 %v997, %v1061
        %v1063 = vpop.f32.mrb[0].mxu0
        %v1064 = vpop.f32.mrb[0].mxu0
        %v1065 = vadd.f32 %v1000, %v1064
        %v1066 = vpop.f32.mrb[0].mxu0
        %1067 = vmatprep.mubr.bf16.mxu0 %v689
        %1068 = vmatmul.mubr.bf16.gmra.mrb[0].mxu0 %v688
        %v1069 = vpop.f32.mrb[0].mxu0
        %v1070 = vadd.f32 %v1005, %v1069
        %v1071 = vpop.f32.mrb[0].mxu0
        %v1072 = vpop.f32.mrb[0].mxu0
        %v1073 = vadd.f32 %v1008, %v1072
        %v1074 = vpop.f32.mrb[0].mxu0
        %1075 = vmatprep.mubr.bf16.mxu0 %v693
        %1076 = vmatmul.mubr.bf16.gmra.mrb[0].mxu0 %v692
        %v1077 = vpop.f32.mrb[0].mxu0
        %v1078 = vadd.f32 %v1013, %v1077
        %v1079 = vpop.f32.mrb[0].mxu0
        %v1080 = vpop.f32.mrb[0].mxu0
        %v1081 = vadd.f32 %v1016, %v1080
        %v1082 = vpop.f32.mrb[0].mxu0
        %1083 = vmatprep.mubr.bf16.mxu0 %v697
        %1084 = vmatmul.mubr.bf16.gmra.mrb[0].mxu0 %v696
        %v1085 = vpop.f32.mrb[0].mxu0
        %v1086 = vadd.f32 %v1021, %v1085
        %v1087 = vpop.f32.mrb[0].mxu0
        %v1088 = vpop.f32.mrb[0].mxu0
        %v1089 = vadd.f32 %v1024, %v1088
        %v1090 = vpop.f32.mrb[0].mxu0
        %1091 = vdwg.mxu0
        %v1092 = vadd.f32 %v762, %v1062
        %v1093 = vadd.f32 %v763, %v1065
        %v1094 = vadd.f32 %v764, %v1070
        %v1095 = vadd.f32 %v765, %v1073
        %v1096 = vadd.f32 %v766, %v1078
        %v1097 = vadd.f32 %v767, %v1081
        %v1098 = vadd.f32 %v768, %v1086
        %v1099 = vadd.f32 %v769, %v1089
        %1100 = vst [vmem:[#allocation2] sm:$0xff] %v1092
        %1101 = vst [vmem:[#allocation2 + $0x8] sm:$0xff] %v1093
        %1102 = vst [vmem:[#allocation2 + $0x10] sm:$0xff] %v1094
        %1103 = vst [vmem:[#allocation2 + $0x18] sm:$0xff] %v1095
        %1104 = vst [vmem:[#allocation2 + $0x20] sm:$0xff] %v1096
        %1105 = vst [vmem:[#allocation2 + $0x28] sm:$0xff] %v1097
        %1106 = vst [vmem:[#allocation2 + $0x30] sm:$0xff] %v1098
        %1107 = vst [vmem:[#allocation2 + $0x38] sm:$0xff] %v1099
        // Predicated region
        $region57: #{tpu_custom_call.1} parent=39 // pred_check
          %p1108 = pneg %p302
        $region58: #{tpu_custom_call.1} parent=39 // pred_check_branch
          %1110 = sbr.rel (%p1108) target = $region60
        $region59: #{tpu_custom_call.1} parent=39 // pred_region
          %v1111 = vld [vmem:[#allocation2] sm:$0xff]
          %v1112 = vld [vmem:[#allocation2 + $0x8] sm:$0xff]
          %v1113 = vld [vmem:[#allocation2 + $0x10] sm:$0xff]
          %v1114 = vld [vmem:[#allocation2 + $0x18] sm:$0xff]
          %v1115 = vld [vmem:[#allocation2 + $0x20] sm:$0xff]
          %v1116 = vld [vmem:[#allocation2 + $0x28] sm:$0xff]
          %v1117 = vld [vmem:[#allocation2 + $0x30] sm:$0xff]
          %v1118 = vld [vmem:[#allocation2 + $0x38] sm:$0xff]
          %v1119 = vld [vmem:[%s2] sm:$0x1]
          %v1121 = vlaneseq
          %v1122 = vshrl.u32 %v1121, 7
          %v1123 = vsub.s32 0, %v1122
          %v1124 = vrot.slane %v1119, %v1123
          %v1126 = vadd.f32 %v1111, %v1124
          %v1127 = vadd.f32 %v1112, %v1124
          %v1128 = vadd.f32 %v1113, %v1124
          %v1129 = vadd.f32 %v1114, %v1124
          %v1130 = vadd.f32 %v1115, %v1124
          %v1131 = vadd.f32 %v1116, %v1124
          %v1132 = vadd.f32 %v1117, %v1124
          %v1133 = vadd.f32 %v1118, %v1124
          %v1134 = vtanh.pop %v1126
          %v1135 = vtanh.pop %v1127
          %v1136 = vtanh.pop %v1128
          %v1137 = vtanh.pop %v1129
          %v1138 = vtanh.pop %v1130
          %v1139 = vtanh.pop %v1131
          %v1140 = vtanh.pop %v1132
          %v1141 = vtanh.pop %v1133
          %v1142 = vld [vmem:[#allocation8] sm:$0xff]
          %v1143 = vld [vmem:[#allocation8 + $0x8] sm:$0xff]
          %v1144 = vld [vmem:[#allocation8 + $0x10] sm:$0xff]
          %v1145 = vld [vmem:[#allocation8 + $0x18] sm:$0xff]
          %v1146 = vld [vmem:[#allocation8 + $0x20] sm:$0xff]
          %v1147 = vld [vmem:[#allocation8 + $0x28] sm:$0xff]
          %v1148 = vld [vmem:[#allocation8 + $0x30] sm:$0xff]
          %v1149 = vld [vmem:[#allocation8 + $0x38] sm:$0xff]
          %v1150 = vld [vmem:[#allocation8 + $0x40] sm:$0xff]
          %v1151 = vld [vmem:[#allocation8 + $0x48] sm:$0xff]
          %v1152 = vld [vmem:[#allocation8 + $0x50] sm:$0xff]
          %v1153 = vld [vmem:[#allocation8 + $0x58] sm:$0xff]
          %v1154 = vld [vmem:[#allocation8 + $0x60] sm:$0xff]
          %v1155 = vld [vmem:[#allocation8 + $0x68] sm:$0xff]
          %v1156 = vld [vmem:[#allocation8 + $0x70] sm:$0xff]
          %v1157 = vld [vmem:[#allocation8 + $0x78] sm:$0xff]
          %v1158 = vld [vmem:[%s4] sm:$0x1]
          %v1160 = vlaneseq
          %v1161 = vshrl.u32 %v1160, 7
          %v1162 = vsub.s32 0, %v1161
          %v1163 = vrot.slane %v1158, %v1162
          %1165 = vmatprep.subr.mxu0 0.0
          %1166 = vmatpush1.msra.mxu0 %v1142
          %1167 = vmatprep.subr.mxu0 0.0
          %1168 = vmatpush1.msra.mxu0 %v1143
          %1169 = vmatprep.subr.mxu0 0.0
          %1170 = vmatpush1.msra.mxu0 %v1144
          %1171 = vmatprep.subr.mxu0 0.0
          %1172 = vmatpush1.msra.mxu0 %v1145
          %1173 = vmatprep.subr.mxu0 0.0
          %1174 = vmatpush1.msra.mxu0 %v1146
          %1175 = vmatprep.subr.mxu0 0.0
          %1176 = vmatpush1.msra.mxu0 %v1147
          %1177 = vmatprep.subr.mxu0 0.0
          %1178 = vmatpush1.msra.mxu0 %v1148
          %1179 = vmatprep.subr.mxu0 0.0
          %1180 = vmatpush1.msra.mxu0 %v1149
          %1181 = vmatprep.subr.mxu0 0.0
          %1182 = vmatpush1.msra.mxu0 %v1150
          %1183 = vmatprep.subr.mxu0 0.0
          %1184 = vmatpush1.msra.mxu0 %v1151
          %1185 = vmatprep.subr.mxu0 0.0
          %1186 = vmatpush1.msra.mxu0 %v1152
          %1187 = vmatprep.subr.mxu0 0.0
          %1188 = vmatpush1.msra.mxu0 %v1153
          %1189 = vmatprep.subr.mxu0 0.0
          %1190 = vmatpush1.msra.mxu0 %v1154
          %1191 = vmatprep.subr.mxu0 0.0
          %1192 = vmatpush1.msra.mxu0 %v1155
          %1193 = vmatprep.subr.mxu0 0.0
          %1194 = vmatpush1.msra.mxu0 %v1156
          %1195 = vmatprep.subr.mxu0 0.0
          %1196 = vmatpush1.msra.mxu0 %v1157
          %1197 = vmatprep.subr.mxu0 0.0
          %1198 = vmatpush1.msra.mxu0 0.0
          %1199 = vmatprep.subr.mxu0 0.0
          %1200 = vmatpush1.msra.mxu0 0.0
          %1201 = vmatprep.subr.mxu0 0.0
          %1202 = vmatpush1.msra.mxu0 0.0
          %1203 = vmatprep.subr.mxu0 0.0
          %1204 = vmatpush1.msra.mxu0 0.0
          %1205 = vmatprep.subr.mxu0 0.0
          %1206 = vmatpush1.msra.mxu0 0.0
          %1207 = vmatprep.subr.mxu0 0.0
          %1208 = vmatpush1.msra.mxu0 0.0
          %1209 = vmatprep.subr.mxu0 0.0
          %1210 = vmatpush1.msra.mxu0 0.0
          %1211 = vmatprep.subr.mxu0 0.0
          %1212 = vmatpush1.msra.mxu0 0.0
          %1213 = vmatprep.subr.mxu0 0.0
          %1214 = vmatpush1.msra.mxu0 0.0
          %1215 = vmatprep.subr.mxu0 0.0
          %1216 = vmatpush1.msra.mxu0 0.0
          %1217 = vmatprep.subr.mxu0 0.0
          %1218 = vmatpush1.msra.mxu0 0.0
          %1219 = vmatprep.subr.mxu0 0.0
          %1220 = vmatpush1.msra.mxu0 0.0
          %1221 = vmatprep.subr.mxu0 0.0
          %1222 = vmatpush1.msra.mxu0 0.0
          %1223 = vmatprep.subr.mxu0 0.0
          %1224 = vmatpush1.msra.mxu0 0.0
          %1225 = vmatprep.subr.mxu0 0.0
          %1226 = vmatpush1.msra.mxu0 0.0
          %1227 = vmatprep.subr.mxu0 0.0
          %1228 = vmatpush1.msra.mxu0 0.0
          %1229 = vmatprep.mubr.f32.mxu0 0.0
          %1230 = vmatmul.mubr.f32.gmra.mrb[0].mxu0 %v1134
          %v1231 = vpop.f32.mrb[0].mxu0
          %v1232 = vadd.f32 %v1163, %v1231
          %v1233 = vpop.f32.mrb[0].mxu0
          %1234 = vmatprep.mubr.f32.mxu0 0.0
          %1235 = vmatmul.mubr.f32.gmra.mrb[0].mxu0 %v1135
          %v1236 = vpop.f32.mrb[0].mxu0
          %v1237 = vadd.f32 %v1163, %v1236
          %v1238 = vpop.f32.mrb[0].mxu0
          %1239 = vmatprep.mubr.f32.mxu0 0.0
          %1240 = vmatmul.mubr.f32.gmra.mrb[0].mxu0 %v1136
          %v1241 = vpop.f32.mrb[0].mxu0
          %v1242 = vadd.f32 %v1163, %v1241
          %v1243 = vpop.f32.mrb[0].mxu0
          %1244 = vmatprep.mubr.f32.mxu0 0.0
          %1245 = vmatmul.mubr.f32.gmra.mrb[0].mxu0 %v1137
          %v1246 = vpop.f32.mrb[0].mxu0
          %v1247 = vadd.f32 %v1163, %v1246
          %v1248 = vpop.f32.mrb[0].mxu0
          %1249 = vmatprep.mubr.f32.mxu0 0.0
          %1250 = vmatmul.mubr.f32.gmra.mrb[0].mxu0 %v1138
          %v1251 = vpop.f32.mrb[0].mxu0
          %v1252 = vadd.f32 %v1163, %v1251
          %v1253 = vpop.f32.mrb[0].mxu0
          %1254 = vmatprep.mubr.f32.mxu0 0.0
          %1255 = vmatmul.mubr.f32.gmra.mrb[0].mxu0 %v1139
          %v1256 = vpop.f32.mrb[0].mxu0
          %v1257 = vadd.f32 %v1163, %v1256
          %v1258 = vpop.f32.mrb[0].mxu0
          %1259 = vmatprep.mubr.f32.mxu0 0.0
          %1260 = vmatmul.mubr.f32.gmra.mrb[0].mxu0 %v1140
          %v1261 = vpop.f32.mrb[0].mxu0
          %v1262 = vadd.f32 %v1163, %v1261
          %v1263 = vpop.f32.mrb[0].mxu0
          %1264 = vmatprep.mubr.f32.mxu0 0.0
          %1265 = vmatmul.mubr.f32.gmra.mrb[0].mxu0 %v1141
          %v1266 = vpop.f32.mrb[0].mxu0
          %v1267 = vadd.f32 %v1163, %v1266
          %v1268 = vpop.f32.mrb[0].mxu0
          %1269 = vdwg.mxu0
          %v1270 = vtanh.pop %v1232
          %v1271 = vtanh.pop %v1237
          %v1272 = vtanh.pop %v1242
          %v1273 = vtanh.pop %v1247
          %v1274 = vtanh.pop %v1252
          %v1275 = vtanh.pop %v1257
          %v1276 = vtanh.pop %v1262
          %v1277 = vtanh.pop %v1267
          %1278 = vst [vmem:[%s296] sm:$0xff] %v1270
          %1279 = vst [vmem:[%s296 + $0x8] sm:$0xff] %v1271
          %1280 = vst [vmem:[%s296 + $0x10] sm:$0xff] %v1272
          %1281 = vst [vmem:[%s296 + $0x18] sm:$0xff] %v1273
          %1282 = vst [vmem:[%s296 + $0x20] sm:$0xff] %v1274
          %1283 = vst [vmem:[%s296 + $0x28] sm:$0xff] %v1275
          %1284 = vst [vmem:[%s296 + $0x30] sm:$0xff] %v1276
          %1285 = vst [vmem:[%s296 + $0x38] sm:$0xff] %v1277
        $region60: #{tpu_custom_call.1} parent=39 // pred_fallthru
          _
        %s1286 = sand.u32 %s160, 1
        %s1287 = scalar_lea.sflag [#allocation5], %s1286
        %s1288 = sand.u32 %s160, 1
        %s1289 = smul.addr %s1288, 64
        %s1290 = scalar_lea.vmem [#allocation9], %s1289
        // Predicated region
        $region61: #{tpu_custom_call.1} parent=39 // pred_check
          %p1291 = pneg %p170
        $region62: #{tpu_custom_call.1} parent=39 // pred_check_branch
          %1293 = sbr.rel (%p1291) target = $region64
        $region63: #{tpu_custom_call.1} parent=39 // pred_region
          %s1294 = smul.u32 8, %s27
          %s1296 = ssub.s32 1024, 1024
          %1297 = vsyncadd %s1287, %s1296
          %s1298 = smul.addr %s1294, 128
          %s1299 = scalar_lea.hbm %s5, %s1298
          %s1300 = sshll.u32 %s1290, 4
          %s1301 = int_to_ptr.vmem [resolvable:$true] %s1300
          %1306 = dma.vmem_to_hbm [thread:$0]  %s1301, 1024, %s1299, %s1287, 128, 128, 8
        $region64: #{tpu_custom_call.1} parent=39 // pred_fallthru
          _
      $region40: #{tpu_custom_call.1} parent=5 // pred_fallthru
        _
      %p1307 = scmp.le.s32.totalorder 2, %s18
      // Predicated region
      $region65: #{tpu_custom_call.1} parent=5 // pred_check
        %p1308 = pneg %p1307
      $region66: #{tpu_custom_call.1} parent=5 // pred_check_branch
        %1310 = sbr.rel (%p1308) target = $region68
      $region67: #{tpu_custom_call.1} parent=5 // pred_region
        %s1311 = ssub.s32 %s18, 2
        // Predicated region
        $region69: #{tpu_custom_call.1} parent=67 // pred_check
          %p1312 = pneg %p176
        $region70: #{tpu_custom_call.1} parent=67 // pred_check_branch
          %1314 = sbr.rel (%p1312) target = $region72
        $region71: #{tpu_custom_call.1} parent=67 // pred_region
          %s1315 = sand.u32 %s161, 1
          %s1316 = scalar_lea.sflag [#allocation5], %s1315
          %s1317 = sand.u32 %s161, 1
          %s1318 = smul.addr %s1317, 64
          %s1319 = scalar_lea.vmem [#allocation9], %s1318
          %1320 = dma.done %s1316, 1024
        $region72: #{tpu_custom_call.1} parent=67 // pred_fallthru
          _
      $region68: #{tpu_custom_call.1} parent=5 // pred_fallthru
        _
    $region6: #{tpu_custom_call.1} parent=1 // loop_footer
      %s22 = sadd.s32 1, %s18
    $region7: #{tpu_custom_call.1} parent=1 // loop_footer_branch
      %17 = sbr.rel target = $region3
    $region8: #{tpu_custom_call.1} parent=1 // loop_exit
      _
    %1321 = vsyncpa [#allocation4], 1
    %s1322 = scalar_lea.sflag [#allocation4], 1
    %1323 = vsyncpa %s1322, 1
    %1324 = vsyncpa [#allocation7], 1
    %1325 = vsyncpa [#allocation5], 1
    %s1326 = scalar_lea.sflag [#allocation5], 1
    %1327 = vsyncpa %s1326, 1

</llo_original>
